<compile_context>
chip_gen: v7x
topology: tpu7x:2x2x1
jax: 0.10.0
libtpu: 0.0.40
codegen_flags: <defaults>
</compile_context>

<pallas_src>
import functools

import jax
import jax.numpy as jnp
from jax import lax
from jax.experimental import pallas as pl
from jax.experimental.pallas import tpu as pltpu


def _mish(v):
    # Mish(x) = x * tanh(softplus(x)) with a single exp (EUP) per element:
    #   tanh(log(1+e)) = n / (n + 2),  n = e*(e+2),  e = exp(x)
    e = jnp.exp(jnp.minimum(v, 20.0))
    n = e * (e + 2.0)
    d = n + 2.0
    r = pl.reciprocal(d, approx=True)
    r = r * (2.0 - d * r)                 # one Newton step -> full f32 accuracy
    return jnp.where(v > 20.0, v, v * (n * r))


def _resblock_kernel(x_ref, w1_ref, b1_ref, w2_ref, b2_ref, m_ref, o_ref, *,
                     W, HW, B_TILE):
    LANES = B_TILE * HW
    x = x_ref[...]                                          # (C_IN, LANES) f32

    # ---- conv1: 1x1 conv == channel matmul (BN scale folded in wrapper) ----
    t = jnp.dot(w1_ref[...], x.astype(jnp.bfloat16),
                preferred_element_type=jnp.float32)         # (C_MID_P, LANES)
    t = _mish(t + b1_ref[...])

    # ---- border masks: 4 edge-validity rows, tiled across the B_TILE images
    m = m_ref[...]                                          # (4, HW) f32 0/1
    if B_TILE > 1:
        m = jnp.concatenate([m] * B_TILE, axis=1)           # (4, LANES)
    up_ok, dn_ok, lf_ok, rt_ok = m[0:1], m[1:2], m[2:3], m[3:4]

    # ---- conv2: 3x3 pad=1 as 9 lane-rolled taps fused into ONE matmul ------
    taps = []
    for ky in range(3):
        for kx in range(3):
            dy, dx = ky - 1, kx - 1
            d = dy * W + dx
            if d == 0:
                taps.append(t)                              # center tap
                continue
            shifted = pltpu.roll(t, (-d) % LANES, axis=1)   # XLU lane roll
            mask = None
            if dy == -1:
                mask = up_ok
            elif dy == 1:
                mask = dn_ok
            if dx == -1:
                mask = lf_ok if mask is None else mask * lf_ok
            elif dx == 1:
                mask = rt_ok if mask is None else mask * rt_ok
            taps.append(shifted * mask)                     # zero the wrap
    stacked = jnp.concatenate(taps, axis=0)                 # (9*C_MID_P, LANES) f32
    acc = jnp.dot(w2_ref[...], stacked.astype(jnp.bfloat16),
                  preferred_element_type=jnp.float32)       # (C_IN, LANES) f32
    out = _mish(acc + b2_ref[...])

    # ---- residual add (f32) ----
    o_ref[...] = (out + x).astype(o_ref.dtype)


def residual_block(x, w1, w2, s1, b1, s2, b2, *,
                   vmem_limit_bytes=64 * 1024 * 1024):
    """x: (N, C_in, H, W) NCHW.  w1: (C_mid, C_in, 1, 1) OIHW.
    w2: (C_in, C_mid, 3, 3) OIHW.  s*/b*: folded BatchNorm scale/bias, (C,)."""
    N, C_IN, H, W = x.shape
    C_MID = w1.shape[0]
    assert w2.shape == (C_IN, C_MID, 3, 3), "conv2 output must equal C_in"
    HW = H * W
    assert HW % 128 == 0, "keep H*W a multiple of 128 (pad spatially otherwise)"
    f32, bf16 = jnp.float32, jnp.bfloat16

    # Pad intermediate channels to a multiple of 8 so the in-kernel tap stack
    # concatenates at sublane-aligned offsets (padded channels are exact zeros).
    C_MID_P = max(8, ((C_MID + 7) // 8) * 8)

    # Fold BN scales into conv weights (bf16 for the MXU), biases stay f32.
    w1f = jnp.zeros((C_MID_P, C_IN), f32).at[:C_MID].set(
        w1[:, :, 0, 0].astype(f32) * s1[:, None])
    b1c = jnp.zeros((C_MID_P, 1), f32).at[:C_MID].set(b1.astype(f32)[:, None])
    w2f = jnp.zeros((C_IN, C_MID_P, 3, 3), f32).at[:, :C_MID].set(
        w2.astype(f32) * s2[:, None, None, None])
    # tap-major stacking: column index = (ky*3 + kx) * C_MID_P + channel
    w2s = jnp.transpose(w2f, (0, 2, 3, 1)).reshape(C_IN, 9 * C_MID_P)
    b2c = b2.astype(f32)[:, None]
    w1f = w1f.astype(bf16)
    w2s = w2s.astype(bf16)

    # Compact edge-validity table: 1.0 where the up/down/left/right neighbour
    # exists (replaces the old 8x-padded (9,1,HW) mask stream).
    yy, xx = jnp.meshgrid(jnp.arange(H), jnp.arange(W), indexing="ij")
    edge = jnp.stack([yy > 0, yy < H - 1, xx > 0, xx < W - 1]
                     ).reshape(4, HW).astype(f32)

    # Batch * spatial on the lane axis -> wide, lane-dense blocks.
    x2 = jnp.transpose(x.reshape(N, C_IN, HW), (1, 0, 2)).reshape(C_IN, N * HW)

    # Each grid step processes B_TILE whole images (blocks must contain whole
    # images so pltpu.roll wraps only at masked image borders).
    bytes_per_img = (2 * C_IN + 12 * C_MID_P) * HW * 4      # rough f32 working set
    B_TILE = max(1, min(N, (8 * 2**20) // max(bytes_per_img, 1)))
    while N % B_TILE:
        B_TILE -= 1
    LANES = B_TILE * HW

    kernel = functools.partial(_resblock_kernel, W=W, HW=HW, B_TILE=B_TILE)
    out = pl.pallas_call(
        kernel,
        out_shape=jax.ShapeDtypeStruct((C_IN, N * HW), x.dtype),
        grid=(N // B_TILE,),
        in_specs=[
            pl.BlockSpec((C_IN, LANES), lambda n: (0, n)),
            pl.BlockSpec((C_MID_P, C_IN), lambda n: (0, 0)),
            pl.BlockSpec((C_MID_P, 1), lambda n: (0, 0)),
            pl.BlockSpec((C_IN, 9 * C_MID_P), lambda n: (0, 0)),
            pl.BlockSpec((C_IN, 1), lambda n: (0, 0)),
            pl.BlockSpec((4, HW), lambda n: (0, 0)),
        ],
        out_specs=pl.BlockSpec((C_IN, LANES), lambda n: (0, n)),
        compiler_params=pltpu.CompilerParams(
            dimension_semantics=("parallel",),
            vmem_limit_bytes=vmem_limit_bytes),
    )(x2, w1f, b1c, w2s, b2c, edge)
    return jnp.transpose(out.reshape(C_IN, N, HW), (1, 0, 2)).reshape(N, C_IN, H, W)


def _fold_bn(gamma, beta, mean, var, eps=1e-5):
    scale = gamma / jnp.sqrt(var + eps)
    return scale, beta - mean * scale


def _mish_ref(v):
    return v * jnp.tanh(jax.nn.softplus(v))


def _reference(x, w1, w2, s1, b1, s2, b2):
    # Pure-JAX f32 reference in PyTorch NCHW / OIHW layout.
    t = lax.conv_general_dilated(
        x, w1, (1, 1), "VALID", dimension_numbers=("NCHW", "OIHW", "NCHW"))
    t = _mish_ref(t * s1[None, :, None, None] + b1[None, :, None, None])
    y = lax.conv_general_dilated(
        t, w2, (1, 1), ((1, 1), (1, 1)),
        dimension_numbers=("NCHW", "OIHW", "NCHW"))
    y = _mish_ref(y * s2[None, :, None, None] + b2[None, :, None, None])
    return x + y


if __name__ == "__main__":
    key = jax.random.PRNGKey(0)
    N, C_IN, H, W = 2, 4, 16, 16
    C_MID = C_IN  # downsample=False

    ks = jax.random.split(key, 11)
    x = jax.random.normal(ks[0], (N, C_IN, H, W), jnp.float32)

    # conv weights (PyTorch OIHW layout), deterministic init
    w1 = jax.random.normal(ks[1], (C_MID, C_IN, 1, 1), jnp.float32) * 0.2
    w2 = jax.random.normal(ks[2], (C_IN, C_MID, 3, 3), jnp.float32) * 0.1

    # BatchNorm params (inference-folded)
    g1 = 1.0 + 0.1 * jax.random.normal(ks[3], (C_MID,), jnp.float32)
    be1 = 0.1 * jax.random.normal(ks[4], (C_MID,), jnp.float32)
    m1 = 0.1 * jax.random.normal(ks[5], (C_MID,), jnp.float32)
    v1 = jnp.abs(1.0 + 0.1 * jax.random.normal(ks[6], (C_MID,), jnp.float32))
    g2 = 1.0 + 0.1 * jax.random.normal(ks[7], (C_IN,), jnp.float32)
    be2 = 0.1 * jax.random.normal(ks[8], (C_IN,), jnp.float32)
    m2 = 0.1 * jax.random.normal(ks[9], (C_IN,), jnp.float32)
    v2 = jnp.abs(1.0 + 0.1 * jax.random.normal(ks[10], (C_IN,), jnp.float32))

    s1, b1 = _fold_bn(g1, be1, m1, v1)
    s2, b2 = _fold_bn(g2, be2, m2, v2)

    out = residual_block(x, w1, w2, s1, b1, s2, b2)
    out = jax.block_until_ready(out)

    ref = _reference(x, w1, w2, s1, b1, s2, b2)
    assert out.shape == x.shape
    err = float(jnp.max(jnp.abs(out - ref)))
    # bf16 matmul operands (f32 accumulation) -> tolerance loosened vs f32.
    assert jnp.allclose(out, ref, atol=3e-2, rtol=3e-2), err

    print("KERNEL_OK")
</pallas_src>

<mosaic_0001>
module attributes {stable_mosaic.version = 11 : i64} {
  func.func @_resblock_kernel(%arg0: i32, %arg1: memref<4x512xf32, #tpu.memory_space<vmem>>, %arg2: memref<8x4xbf16, #tpu.memory_space<vmem>>, %arg3: memref<8x1xf32, #tpu.memory_space<vmem>>, %arg4: memref<4x72xbf16, #tpu.memory_space<vmem>>, %arg5: memref<4x1xf32, #tpu.memory_space<vmem>>, %arg6: memref<4x256xf32, #tpu.memory_space<vmem>>, %arg7: memref<4x512xf32, #tpu.memory_space<vmem>>) attributes {dimension_semantics = [#tpu.dimension_semantics<parallel>], iteration_bounds = array<i64: 1>, scalar_prefetch = 0 : i64, scratch_operands = 0 : i64, tpu.core_type = #tpu.core_type<tc>, window_params = [{transform_indices = @transform_0, window_bounds = array<i64: 4, 512>}, {pipeline_mode = #tpu.pipeline_mode<synchronous>, transform_indices = @transform_1, window_bounds = array<i64: 8, 4>}, {pipeline_mode = #tpu.pipeline_mode<synchronous>, transform_indices = @transform_2, window_bounds = array<i64: 8, 1>}, {pipeline_mode = #tpu.pipeline_mode<synchronous>, transform_indices = @transform_3, window_bounds = array<i64: 4, 72>}, {pipeline_mode = #tpu.pipeline_mode<synchronous>, transform_indices = @transform_4, window_bounds = array<i64: 4, 1>}, {pipeline_mode = #tpu.pipeline_mode<synchronous>, transform_indices = @transform_5, window_bounds = array<i64: 4, 256>}, {transform_indices = @transform_6, window_bounds = array<i64: 4, 512>}]} {
    %c0 = arith.constant 0 : index
    %c0_0 = arith.constant 0 : index
    %0 = vector.load %arg1[%c0, %c0_0] : memref<4x512xf32, #tpu.memory_space<vmem>>, vector<4x512xf32>
    %c0_1 = arith.constant 0 : index
    %c0_2 = arith.constant 0 : index
    %1 = vector.load %arg2[%c0_1, %c0_2] : memref<8x4xbf16, #tpu.memory_space<vmem>>, vector<8x4xbf16>
    %2 = arith.truncf %0 : vector<4x512xf32> to vector<4x512xbf16>
    %cst = arith.constant dense<0.000000e+00> : vector<8x512xf32>
    %3 = tpu.matmul %1, %2, %cst {dimension_numbers = #tpu.dot_dimension_numbers<[1], [0], [0], [1], [0, 0, 1, 1], [], []>} : vector<8x4xbf16>, vector<4x512xbf16>, vector<8x512xf32> -> vector<8x512xf32>
    %c0_3 = arith.constant 0 : index
    %c0_4 = arith.constant 0 : index
    %4 = vector.load %arg3[%c0_3, %c0_4] : memref<8x1xf32, #tpu.memory_space<vmem>>, vector<8x1xf32>
    %5 = vector.broadcast %4 : vector<8x1xf32> to vector<8x512xf32>
    %6 = arith.addf %3, %5 : vector<8x512xf32>
    %cst_5 = arith.constant 2.000000e+01 : f32
    %7 = vector.broadcast %cst_5 : f32 to vector<8x512xf32>
    %8 = arith.minimumf %6, %7 : vector<8x512xf32>
    %9 = math.exp %8 : vector<8x512xf32>
    %cst_6 = arith.constant 2.000000e+00 : f32
    %10 = vector.broadcast %cst_6 : f32 to vector<8x512xf32>
    %11 = arith.addf %9, %10 : vector<8x512xf32>
    %12 = arith.mulf %9, %11 : vector<8x512xf32>
    %cst_7 = arith.constant 2.000000e+00 : f32
    %13 = vector.broadcast %cst_7 : f32 to vector<8x512xf32>
    %14 = arith.addf %12, %13 : vector<8x512xf32>
    %15 = tpu.reciprocal %14 {approx = true} : vector<8x512xf32> -> vector<8x512xf32>
    %16 = arith.mulf %14, %15 : vector<8x512xf32>
    %cst_8 = arith.constant 2.000000e+00 : f32
    %17 = vector.broadcast %cst_8 : f32 to vector<8x512xf32>
    %18 = arith.subf %17, %16 : vector<8x512xf32>
    %19 = arith.mulf %15, %18 : vector<8x512xf32>
    %cst_9 = arith.constant 2.000000e+01 : f32
    %20 = vector.broadcast %cst_9 : f32 to vector<8x512xf32>
    %21 = arith.cmpf ogt, %6, %20 : vector<8x512xf32>
    %22 = arith.mulf %12, %19 : vector<8x512xf32>
    %23 = arith.mulf %6, %22 : vector<8x512xf32>
    %24 = arith.select %21, %6, %23 : vector<8x512xi1>, vector<8x512xf32>
    %c0_10 = arith.constant 0 : index
    %c0_11 = arith.constant 0 : index
    %25 = vector.load %arg6[%c0_10, %c0_11] : memref<4x256xf32, #tpu.memory_space<vmem>>, vector<4x256xf32>
    %26 = tpu.concatenate %25, %25 in 1 : vector<4x256xf32>, vector<4x256xf32> -> vector<4x512xf32>
    %27 = vector.extract_strided_slice %26 {offsets = [0, 0], sizes = [1, 512], strides = [1, 1]} : vector<4x512xf32> to vector<1x512xf32>
    %28 = vector.extract_strided_slice %26 {offsets = [1, 0], sizes = [1, 512], strides = [1, 1]} : vector<4x512xf32> to vector<1x512xf32>
    %29 = vector.extract_strided_slice %26 {offsets = [2, 0], sizes = [1, 512], strides = [1, 1]} : vector<4x512xf32> to vector<1x512xf32>
    %30 = vector.extract_strided_slice %26 {offsets = [3, 0], sizes = [1, 512], strides = [1, 1]} : vector<4x512xf32> to vector<1x512xf32>
    %c17_i32 = arith.constant 17 : i32
    %31 = tpu.dynamic_rotate %24 by %c17_i32 dim 1 : vector<8x512xf32>, i32 -> vector<8x512xf32>
    %32 = arith.mulf %27, %29 : vector<1x512xf32>
    %33 = vector.broadcast %32 : vector<1x512xf32> to vector<8x512xf32>
    %34 = arith.mulf %31, %33 : vector<8x512xf32>
    %c16_i32 = arith.constant 16 : i32
    %35 = tpu.dynamic_rotate %24 by %c16_i32 dim 1 : vector<8x512xf32>, i32 -> vector<8x512xf32>
    %36 = vector.broadcast %27 : vector<1x512xf32> to vector<8x512xf32>
    %37 = arith.mulf %35, %36 : vector<8x512xf32>
    %c15_i32 = arith.constant 15 : i32
    %38 = tpu.dynamic_rotate %24 by %c15_i32 dim 1 : vector<8x512xf32>, i32 -> vector<8x512xf32>
    %39 = arith.mulf %27, %30 : vector<1x512xf32>
    %40 = vector.broadcast %39 : vector<1x512xf32> to vector<8x512xf32>
    %41 = arith.mulf %38, %40 : vector<8x512xf32>
    %c1_i32 = arith.constant 1 : i32
    %42 = tpu.dynamic_rotate %24 by %c1_i32 dim 1 : vector<8x512xf32>, i32 -> vector<8x512xf32>
    %43 = vector.broadcast %29 : vector<1x512xf32> to vector<8x512xf32>
    %44 = arith.mulf %42, %43 : vector<8x512xf32>
    %c511_i32 = arith.constant 511 : i32
    %45 = tpu.dynamic_rotate %24 by %c511_i32 dim 1 : vector<8x512xf32>, i32 -> vector<8x512xf32>
    %46 = vector.broadcast %30 : vector<1x512xf32> to vector<8x512xf32>
    %47 = arith.mulf %45, %46 : vector<8x512xf32>
    %c497_i32 = arith.constant 497 : i32
    %48 = tpu.dynamic_rotate %24 by %c497_i32 dim 1 : vector<8x512xf32>, i32 -> vector<8x512xf32>
    %49 = arith.mulf %28, %29 : vector<1x512xf32>
    %50 = vector.broadcast %49 : vector<1x512xf32> to vector<8x512xf32>
    %51 = arith.mulf %48, %50 : vector<8x512xf32>
    %c496_i32 = arith.constant 496 : i32
    %52 = tpu.dynamic_rotate %24 by %c496_i32 dim 1 : vector<8x512xf32>, i32 -> vector<8x512xf32>
    %53 = vector.broadcast %28 : vector<1x512xf32> to vector<8x512xf32>
    %54 = arith.mulf %52, %53 : vector<8x512xf32>
    %c495_i32 = arith.constant 495 : i32
    %55 = tpu.dynamic_rotate %24 by %c495_i32 dim 1 : vector<8x512xf32>, i32 -> vector<8x512xf32>
    %56 = arith.mulf %28, %30 : vector<1x512xf32>
    %57 = vector.broadcast %56 : vector<1x512xf32> to vector<8x512xf32>
    %58 = arith.mulf %55, %57 : vector<8x512xf32>
    %59 = tpu.concatenate %34, %37, %41, %44, %24, %47, %51, %54, %58 in 0 : vector<8x512xf32>, vector<8x512xf32>, vector<8x512xf32>, vector<8x512xf32>, vector<8x512xf32>, vector<8x512xf32>, vector<8x512xf32>, vector<8x512xf32>, vector<8x512xf32> -> vector<72x512xf32>
    %c0_12 = arith.constant 0 : index
    %c0_13 = arith.constant 0 : index
    %60 = vector.load %arg4[%c0_12, %c0_13] : memref<4x72xbf16, #tpu.memory_space<vmem>>, vector<4x72xbf16>
    %61 = arith.truncf %59 : vector<72x512xf32> to vector<72x512xbf16>
    %cst_14 = arith.constant dense<0.000000e+00> : vector<4x512xf32>
    %62 = tpu.matmul %60, %61, %cst_14 {dimension_numbers = #tpu.dot_dimension_numbers<[1], [0], [0], [1], [0, 0, 1, 1], [], []>} : vector<4x72xbf16>, vector<72x512xbf16>, vector<4x512xf32> -> vector<4x512xf32>
    %c0_15 = arith.constant 0 : index
    %c0_16 = arith.constant 0 : index
    %63 = vector.load %arg5[%c0_15, %c0_16] : memref<4x1xf32, #tpu.memory_space<vmem>>, vector<4x1xf32>
    %64 = vector.broadcast %63 : vector<4x1xf32> to vector<4x512xf32>
    %65 = arith.addf %62, %64 : vector<4x512xf32>
    %cst_17 = arith.constant 2.000000e+01 : f32
    %66 = vector.broadcast %cst_17 : f32 to vector<4x512xf32>
    %67 = arith.minimumf %65, %66 : vector<4x512xf32>
    %68 = math.exp %67 : vector<4x512xf32>
    %cst_18 = arith.constant 2.000000e+00 : f32
    %69 = vector.broadcast %cst_18 : f32 to vector<4x512xf32>
    %70 = arith.addf %68, %69 : vector<4x512xf32>
    %71 = arith.mulf %68, %70 : vector<4x512xf32>
    %cst_19 = arith.constant 2.000000e+00 : f32
    %72 = vector.broadcast %cst_19 : f32 to vector<4x512xf32>
    %73 = arith.addf %71, %72 : vector<4x512xf32>
    %74 = tpu.reciprocal %73 {approx = true} : vector<4x512xf32> -> vector<4x512xf32>
    %75 = arith.mulf %73, %74 : vector<4x512xf32>
    %cst_20 = arith.constant 2.000000e+00 : f32
    %76 = vector.broadcast %cst_20 : f32 to vector<4x512xf32>
    %77 = arith.subf %76, %75 : vector<4x512xf32>
    %78 = arith.mulf %74, %77 : vector<4x512xf32>
    %cst_21 = arith.constant 2.000000e+01 : f32
    %79 = vector.broadcast %cst_21 : f32 to vector<4x512xf32>
    %80 = arith.cmpf ogt, %65, %79 : vector<4x512xf32>
    %81 = arith.mulf %71, %78 : vector<4x512xf32>
    %82 = arith.mulf %65, %81 : vector<4x512xf32>
    %83 = arith.select %80, %65, %82 : vector<4x512xi1>, vector<4x512xf32>
    %84 = arith.addf %83, %0 : vector<4x512xf32>
    %c0_22 = arith.constant 0 : index
    %c0_23 = arith.constant 0 : index
    %85 = vector.load %arg7[%c0_22, %c0_23] : memref<4x512xf32, #tpu.memory_space<vmem>>, vector<4x512xf32>
    tpu.vector_store %arg7[%c0_22, %c0_23], %84 {strides = array<i32>} : memref<4x512xf32, #tpu.memory_space<vmem>>, vector<4x512xf32>,
    return
  }
  func.func @transform_0(%arg0: i32) -> (i32, i32) {
    %c0_i32 = arith.constant 0 : i32
    %c0_i32_0 = arith.constant 0 : i32
    return %c0_i32, %arg0 : i32, i32
  }
  func.func @transform_1(%arg0: i32) -> (i32, i32) {
    %c0_i32 = arith.constant 0 : i32
    %c0_i32_0 = arith.constant 0 : i32
    %c0_i32_1 = arith.constant 0 : i32
    return %c0_i32, %c0_i32_0 : i32, i32
  }
  func.func @transform_2(%arg0: i32) -> (i32, i32) {
    %c0_i32 = arith.constant 0 : i32
    %c0_i32_0 = arith.constant 0 : i32
    %c0_i32_1 = arith.constant 0 : i32
    return %c0_i32, %c0_i32_0 : i32, i32
  }
  func.func @transform_3(%arg0: i32) -> (i32, i32) {
    %c0_i32 = arith.constant 0 : i32
    %c0_i32_0 = arith.constant 0 : i32
    %c0_i32_1 = arith.constant 0 : i32
    return %c0_i32, %c0_i32_0 : i32, i32
  }
  func.func @transform_4(%arg0: i32) -> (i32, i32) {
    %c0_i32 = arith.constant 0 : i32
    %c0_i32_0 = arith.constant 0 : i32
    %c0_i32_1 = arith.constant 0 : i32
    return %c0_i32, %c0_i32_0 : i32, i32
  }
  func.func @transform_5(%arg0: i32) -> (i32, i32) {
    %c0_i32 = arith.constant 0 : i32
    %c0_i32_0 = arith.constant 0 : i32
    %c0_i32_1 = arith.constant 0 : i32
    return %c0_i32, %c0_i32_0 : i32, i32
  }
  func.func @transform_6(%arg0: i32) -> (i32, i32) {
    %c0_i32 = arith.constant 0 : i32
    %c0_i32_0 = arith.constant 0 : i32
    return %c0_i32, %arg0 : i32, i32
  }
}

</mosaic_0001>

<llo_original>
// kernel: tpu_custom_call.1
$region0: #{tpu_custom_call.1}
  #allocation0 [shape = 'u32[]', space=smem, size = 0x4, offset = 0x4, fixed_abs, tag = 'smem constant byte address 0x4 - core index']
  #allocation1 [shape = 'u32[144,128]{1,0:T(1,128)}', space=vmem, size = 0x12000, scoped, tag = 'internal scratch']
  %s0 = inlined_call_operand.hbm [shape: f32[4,512], index: 0, kind: input, shape index: {}]
  %s1 = inlined_call_operand.hbm [shape: bf16[8,4], index: 1, kind: input, shape index: {}]
  %s2 = inlined_call_operand.hbm [shape: f32[8,1], index: 2, kind: input, shape index: {}]
  %s3 = inlined_call_operand.hbm [shape: bf16[4,72], index: 3, kind: input, shape index: {}]
  %s4 = inlined_call_operand.hbm [shape: f32[4,1], index: 4, kind: input, shape index: {}]
  %s5 = inlined_call_operand.hbm [shape: f32[4,256], index: 5, kind: input, shape index: {}]
  %s6 = inlined_call_operand.hbm [shape: f32[4,512], index: 6, kind: output, shape index: {}]
  %s7 = sld [smem:[#allocation0]]
  $region58: #{tpu_custom_call.1} parent=0
    _
  %s9 = ssub.s32 1, %s7
  %s10 = scalar_select 0, %s9, %s7
  $region1: #{tpu_custom_call.1} parent=0
    #allocation2 [shape = 'u8[8192]{0}', space=vmem, size = 0x2000, scoped, tag = 'input window, operand 0, single buffered']
    #allocation3 [shape = 's32[1]{0}', space=sflag, size = 0x4, scoped, tag = 'scoped memory for tpu_custom_call.1']
    #allocation4 [shape = 's32[1]{0}', space=sflag, size = 0x4, scoped, tag = 'scoped memory for tpu_custom_call.1']
    #allocation5 [shape = 'u8[2048]{0}', space=vmem, size = 0x800, scoped, tag = 'input window, operand 1, single buffered']
    #allocation6 [shape = 's32[1]{0}', space=sflag, size = 0x4, scoped, tag = 'scoped memory for tpu_custom_call.1']
    #allocation7 [shape = 'u8[4096]{0}', space=vmem, size = 0x1000, scoped, tag = 'input window, operand 2, single buffered']
    #allocation8 [shape = 'u8[1024]{0}', space=vmem, size = 0x400, scoped, tag = 'input window, operand 3, single buffered']
    #allocation9 [shape = 's32[1]{0}', space=sflag, size = 0x4, scoped, tag = 'scoped memory for tpu_custom_call.1']
    #allocation10 [shape = 'u8[2048]{0}', space=vmem, size = 0x800, scoped, tag = 'input window, operand 4, single buffered']
    #allocation11 [shape = 'u8[4096]{0}', space=vmem, size = 0x1000, scoped, tag = 'input window, operand 5, single buffered']
    #allocation12 [shape = 's32[1]{0}', space=sflag, size = 0x4, scoped, tag = 'scoped memory for tpu_custom_call.1']
    #allocation13 [shape = 'u8[8192]{0}', space=vmem, size = 0x2000, scoped, tag = 'output window, operand 0, single buffered']
    %11 = vsyncpa [#allocation3], 0
    %12 = vsyncpa [#allocation6], 0
    %13 = vsyncpa [#allocation9], 0
    %14 = vsyncpa [#allocation12], 0
    %15 = vsyncpa [#allocation4], 0
    // Predicated region
    $region2: #{tpu_custom_call.1} parent=1 // pred_check
      _
    $region3: #{tpu_custom_call.1} parent=1 // pred_check_branch
      %17 = sbr.rel (0) target = $region5
    $region4: #{tpu_custom_call.1} parent=1 // pred_region
      %s19 = ssub.s32 256, 256
      %20 = vsyncadd [#allocation3], %s19
      %s22 = sshll.u32 [#allocation2], 4
      %s23 = int_to_ptr.vmem [resolvable:$true] %s22
      %25 = dma.hbm_to_vmem [thread:$0]  %s0, 256, %s23, [#allocation3]
    $region5: #{tpu_custom_call.1} parent=1 // pred_fallthru
      _
    // Predicated region
    $region6: #{tpu_custom_call.1} parent=1 // pred_check
      _
    $region7: #{tpu_custom_call.1} parent=1 // pred_check_branch
      %27 = sbr.rel (0) target = $region9
    $region8: #{tpu_custom_call.1} parent=1 // pred_region
      %s29 = ssub.s32 64, 64
      %30 = vsyncadd [#allocation6], %s29
      %s32 = sshll.u32 [#allocation5], 4
      %s33 = int_to_ptr.vmem [resolvable:$true] %s32
      %35 = dma.hbm_to_vmem [thread:$0]  %s1, 64, %s33, [#allocation6]
    $region9: #{tpu_custom_call.1} parent=1 // pred_fallthru
      _
    // Predicated region
    $region10: #{tpu_custom_call.1} parent=1 // pred_check
      _
    $region11: #{tpu_custom_call.1} parent=1 // pred_check_branch
      %37 = sbr.rel (0) target = $region13
    $region12: #{tpu_custom_call.1} parent=1 // pred_region
      %s39 = ssub.s32 128, 128
      %40 = vsyncadd [#allocation6], %s39
      %s42 = sshll.u32 [#allocation7], 4
      %s43 = int_to_ptr.vmem [resolvable:$true] %s42
      %45 = dma.hbm_to_vmem [thread:$0]  %s2, 128, %s43, [#allocation6]
    $region13: #{tpu_custom_call.1} parent=1 // pred_fallthru
      _
    // Predicated region
    $region14: #{tpu_custom_call.1} parent=1 // pred_check
      _
    $region15: #{tpu_custom_call.1} parent=1 // pred_check_branch
      %47 = sbr.rel (0) target = $region17
    $region16: #{tpu_custom_call.1} parent=1 // pred_region
      %s49 = ssub.s32 32, 32
      %50 = vsyncadd [#allocation9], %s49
      %s52 = sshll.u32 [#allocation8], 4
      %s53 = int_to_ptr.vmem [resolvable:$true] %s52
      %55 = dma.hbm_to_vmem [thread:$0]  %s3, 32, %s53, [#allocation9]
    $region17: #{tpu_custom_call.1} parent=1 // pred_fallthru
      _
    // Predicated region
    $region18: #{tpu_custom_call.1} parent=1 // pred_check
      _
    $region19: #{tpu_custom_call.1} parent=1 // pred_check_branch
      %57 = sbr.rel (0) target = $region21
    $region20: #{tpu_custom_call.1} parent=1 // pred_region
      %s59 = ssub.s32 64, 64
      %60 = vsyncadd [#allocation9], %s59
      %s62 = sshll.u32 [#allocation10], 4
      %s63 = int_to_ptr.vmem [resolvable:$true] %s62
      %65 = dma.hbm_to_vmem [thread:$0]  %s4, 64, %s63, [#allocation9]
    $region21: #{tpu_custom_call.1} parent=1 // pred_fallthru
      _
    // Predicated region
    $region22: #{tpu_custom_call.1} parent=1 // pred_check
      _
    $region23: #{tpu_custom_call.1} parent=1 // pred_check_branch
      %67 = sbr.rel (0) target = $region25
    $region24: #{tpu_custom_call.1} parent=1 // pred_region
      %s69 = ssub.s32 128, 128
      %70 = vsyncadd [#allocation12], %s69
      %s72 = sshll.u32 [#allocation11], 4
      %s73 = int_to_ptr.vmem [resolvable:$true] %s72
      %75 = dma.hbm_to_vmem [thread:$0]  %s5, 128, %s73, [#allocation12]
    $region25: #{tpu_custom_call.1} parent=1 // pred_fallthru
      _
    // Predicated region
    $region26: #{tpu_custom_call.1} parent=1 // pred_check
      _
    $region27: #{tpu_custom_call.1} parent=1 // pred_check_branch
      %77 = sbr.rel (0) target = $region29
    $region28: #{tpu_custom_call.1} parent=1 // pred_region
      %78 = dma.done [#allocation3], 256
    $region29: #{tpu_custom_call.1} parent=1 // pred_fallthru
      _
    // Predicated region
    $region30: #{tpu_custom_call.1} parent=1 // pred_check
      _
    $region31: #{tpu_custom_call.1} parent=1 // pred_check_branch
      %80 = sbr.rel (0) target = $region33
    $region32: #{tpu_custom_call.1} parent=1 // pred_region
      %81 = dma.done [#allocation6], 64
    $region33: #{tpu_custom_call.1} parent=1 // pred_fallthru
      _
    // Predicated region
    $region34: #{tpu_custom_call.1} parent=1 // pred_check
      _
    $region35: #{tpu_custom_call.1} parent=1 // pred_check_branch
      %83 = sbr.rel (0) target = $region37
    $region36: #{tpu_custom_call.1} parent=1 // pred_region
      %84 = dma.done [#allocation6], 128
    $region37: #{tpu_custom_call.1} parent=1 // pred_fallthru
      _
    // Predicated region
    $region38: #{tpu_custom_call.1} parent=1 // pred_check
      _
    $region39: #{tpu_custom_call.1} parent=1 // pred_check_branch
      %86 = sbr.rel (0) target = $region41
    $region40: #{tpu_custom_call.1} parent=1 // pred_region
      %87 = dma.done [#allocation9], 32
    $region41: #{tpu_custom_call.1} parent=1 // pred_fallthru
      _
    // Predicated region
    $region42: #{tpu_custom_call.1} parent=1 // pred_check
      _
    $region43: #{tpu_custom_call.1} parent=1 // pred_check_branch
      %89 = sbr.rel (0) target = $region45
    $region44: #{tpu_custom_call.1} parent=1 // pred_region
      %90 = dma.done [#allocation9], 64
    $region45: #{tpu_custom_call.1} parent=1 // pred_fallthru
      _
    // Predicated region
    $region46: #{tpu_custom_call.1} parent=1 // pred_check
      _
    $region47: #{tpu_custom_call.1} parent=1 // pred_check_branch
      %92 = sbr.rel (0) target = $region49
    $region48: #{tpu_custom_call.1} parent=1 // pred_region
      %93 = dma.done [#allocation12], 128
    $region49: #{tpu_custom_call.1} parent=1 // pred_fallthru
      _
    %v95 = vld [vmem:[#allocation2] sm:$0xff]
    %v96 = vld [vmem:[#allocation2 + $0x8] sm:$0xff]
    %v97 = vld [vmem:[#allocation5] sm:$0xf]
    %v100 = vcombine.high %v95, %v95
    %v101 = vcombine.high %v96, %v96
    %v104 = vpack.c.bf16 %v95, %v95
    %v105 = vpack.c.bf16 %v100, %v100
    %v106 = vpack.c.bf16 %v96, %v96
    %v107 = vpack.c.bf16 %v101, %v101
    %v108 = vld [vmem:[#allocation7] sm:$0xff]
    %110 = vset.pattern.permute.xlu0 0
    %111 = vperm.xlu0 %110, %v108
    %v112 = vpop.permute.xlu0 %111
    %vm114 = vcmask 31744
    %v116 = vsel %vm114, %v97, 0
    %vm118 = vcmask 1041408
    %v120 = vsel %vm118, %v104, 0
    %v123 = vsel %vm118, %v105, 0
    %v126 = vsel %vm118, %v106, 0
    %v129 = vsel %vm118, %v107, 0
    %131 = vmatprep.subr.bf16.mxu0 %v123
    %132 = vmatpush1.bf16.msra.mxu0 %v120
    %133 = vmatprep.subr.bf16.mxu0 0
    %134 = vmatpush1.bf16.msra.mxu0 0
    %135 = vmatprep.subr.bf16.mxu0 0
    %136 = vmatpush1.bf16.msra.mxu0 0
    %137 = vmatprep.subr.bf16.mxu0 0
    %138 = vmatpush1.bf16.msra.mxu0 0
    %139 = vmatprep.subr.bf16.mxu0 0
    %140 = vmatpush1.bf16.msra.mxu0 0
    %141 = vmatprep.subr.bf16.mxu0 0
    %142 = vmatpush1.bf16.msra.mxu0 0
    %143 = vmatprep.subr.bf16.mxu0 0
    %144 = vmatpush1.bf16.msra.mxu0 0
    %145 = vmatprep.subr.bf16.mxu0 0
    %146 = vmatpush1.bf16.msra.mxu0 0
    %147 = vmatprep.subr.bf16.mxu0 0
    %148 = vmatpush1.bf16.msra.mxu0 0
    %149 = vmatprep.subr.bf16.mxu0 0
    %150 = vmatpush1.bf16.msra.mxu0 0
    %151 = vmatprep.subr.bf16.mxu0 0
    %152 = vmatpush1.bf16.msra.mxu0 0
    %153 = vmatprep.subr.bf16.mxu0 0
    %154 = vmatpush1.bf16.msra.mxu0 0
    %155 = vmatprep.subr.bf16.mxu0 0
    %156 = vmatpush1.bf16.msra.mxu0 0
    %157 = vmatprep.subr.bf16.mxu0 0
    %158 = vmatpush1.bf16.msra.mxu0 0
    %159 = vmatprep.subr.bf16.mxu0 0
    %160 = vmatpush1.bf16.msra.mxu0 0
    %161 = vmatprep.subr.bf16.mxu0 0
    %162 = vmatpush1.bf16.msra.mxu0 0
    %163 = vmatprep.mubr.bf16.mxu0 0
    %164 = vmatmul.mubr.bf16.gmra.mrb[0].mxu0 %v116
    %v165 = vpop.f32.mrb[0].mxu0
    %v166 = vadd.f32 %v112, %v165
    %v167 = vpop.f32.mrb[0].mxu0
    %v168 = vadd.f32 %v112, %v167
    %v169 = vpop.f32.mrb[0].mxu0
    %v170 = vpop.f32.mrb[0].mxu0
    %171 = vdwg.mxu0
    %172 = vmatprep.subr.bf16.mxu0 %v129
    %173 = vmatpush1.bf16.msra.mxu0 %v126
    %174 = vmatprep.subr.bf16.mxu0 0
    %175 = vmatpush1.bf16.msra.mxu0 0
    %176 = vmatprep.subr.bf16.mxu0 0
    %177 = vmatpush1.bf16.msra.mxu0 0
    %178 = vmatprep.subr.bf16.mxu0 0
    %179 = vmatpush1.bf16.msra.mxu0 0
    %180 = vmatprep.subr.bf16.mxu0 0
    %181 = vmatpush1.bf16.msra.mxu0 0
    %182 = vmatprep.subr.bf16.mxu0 0
    %183 = vmatpush1.bf16.msra.mxu0 0
    %184 = vmatprep.subr.bf16.mxu0 0
    %185 = vmatpush1.bf16.msra.mxu0 0
    %186 = vmatprep.subr.bf16.mxu0 0
    %187 = vmatpush1.bf16.msra.mxu0 0
    %188 = vmatprep.subr.bf16.mxu0 0
    %189 = vmatpush1.bf16.msra.mxu0 0
    %190 = vmatprep.subr.bf16.mxu0 0
    %191 = vmatpush1.bf16.msra.mxu0 0
    %192 = vmatprep.subr.bf16.mxu0 0
    %193 = vmatpush1.bf16.msra.mxu0 0
    %194 = vmatprep.subr.bf16.mxu0 0
    %195 = vmatpush1.bf16.msra.mxu0 0
    %196 = vmatprep.subr.bf16.mxu0 0
    %197 = vmatpush1.bf16.msra.mxu0 0
    %198 = vmatprep.subr.bf16.mxu0 0
    %199 = vmatpush1.bf16.msra.mxu0 0
    %200 = vmatprep.subr.bf16.mxu0 0
    %201 = vmatpush1.bf16.msra.mxu0 0
    %202 = vmatprep.subr.bf16.mxu0 0
    %203 = vmatpush1.bf16.msra.mxu0 0
    %204 = vmatprep.mubr.bf16.mxu0 0
    %205 = vmatmul.mubr.bf16.gmra.mrb[0].mxu0 %v116
    %v206 = vpop.f32.mrb[0].mxu0
    %v207 = vadd.f32 %v112, %v206
    %v208 = vpop.f32.mrb[0].mxu0
    %v209 = vadd.f32 %v112, %v208
    %v210 = vpop.f32.mrb[0].mxu0
    %v211 = vpop.f32.mrb[0].mxu0
    %212 = vdwg.mxu0
    %v213 = vmin.f32 %v166, 20.0
    %v214 = vmin.f32 %v168, 20.0
    %v215 = vmin.f32 %v207, 20.0
    %v216 = vmin.f32 %v209, 20.0
    %v217 = vmul.f32 %v213, 1.442695
    %v218 = vpow.pop %v217
    %v219 = vmul.f32 %v214, 1.442695
    %v220 = vpow.pop %v219
    %v221 = vmul.f32 %v215, 1.442695
    %v222 = vpow.pop %v221
    %v223 = vmul.f32 %v216, 1.442695
    %v224 = vpow.pop %v223
    %v225 = vadd.f32 %v218, 2.0
    %v226 = vadd.f32 %v220, 2.0
    %v227 = vadd.f32 %v222, 2.0
    %v228 = vadd.f32 %v224, 2.0
    %v229 = vmul.f32 %v218, %v225
    %v230 = vmul.f32 %v220, %v226
    %v231 = vmul.f32 %v222, %v227
    %v232 = vmul.f32 %v224, %v228
    %v233 = vadd.f32 %v229, 2.0
    %v234 = vadd.f32 %v230, 2.0
    %v235 = vadd.f32 %v231, 2.0
    %v236 = vadd.f32 %v232, 2.0
    %v237 = vrcp.pop %v233
    %v238 = vrcp.pop %v234
    %v239 = vrcp.pop %v235
    %v240 = vrcp.pop %v236
    %v241 = vmul.f32 %v233, %v237
    %v242 = vmul.f32 %v234, %v238
    %v243 = vmul.f32 %v235, %v239
    %v244 = vmul.f32 %v236, %v240
    %v245 = vsub.f32 2.0, %v241
    %v246 = vsub.f32 2.0, %v242
    %v247 = vsub.f32 2.0, %v243
    %v248 = vsub.f32 2.0, %v244
    %v249 = vmul.f32 %v237, %v245
    %v250 = vmul.f32 %v238, %v246
    %v251 = vmul.f32 %v239, %v247
    %v252 = vmul.f32 %v240, %v248
    %vm253 = vcmp.gt.f32.partialorder %v166, 20.0
    %vm254 = vcmp.gt.f32.partialorder %v168, 20.0
    %vm255 = vcmp.gt.f32.partialorder %v207, 20.0
    %vm256 = vcmp.gt.f32.partialorder %v209, 20.0
    %v257 = vmul.f32 %v229, %v249
    %v258 = vmul.f32 %v230, %v250
    %v259 = vmul.f32 %v231, %v251
    %v260 = vmul.f32 %v232, %v252
    %v261 = vmul.f32 %v166, %v257
    %v262 = vmul.f32 %v168, %v258
    %v263 = vmul.f32 %v207, %v259
    %v264 = vmul.f32 %v209, %v260
    %v265 = vsel %vm253, %v166, %v261
    %v266 = vsel %vm254, %v168, %v262
    %v267 = vsel %vm255, %v207, %v263
    %v268 = vsel %vm256, %v209, %v264
    %v269 = vld [vmem:[#allocation11] sm:$0xff]
    %v271 = vcombine.high %v269, %v269
    %273 = vrot.lane.b32.xlu0 %v265, 17
    %v274 = vpop.permute.xlu0 %273
    %275 = vrot.lane.b32.xlu0 %v266, 17
    %v276 = vpop.permute.xlu0 %275
    %277 = vrot.lane.b32.xlu0 %v267, 17
    %v278 = vpop.permute.xlu0 %277
    %279 = vrot.lane.b32.xlu0 %v268, 17
    %v280 = vpop.permute.xlu0 %279
    %v281 = vlaneseq
    %v282 = vand.u32 %v281, 127
    %vm283 = vcmp.lt.s32.totalorder %v282, 17
    %v284 = vsel %vm283, %v278, %v280
    %v285 = vsel %vm283, %v276, %v278
    %v286 = vsel %vm283, %v274, %v276
    %v287 = vsel %vm283, %v280, %v274
    %v288 = vrot.slane %v269, 2
    %v289 = vrot.slane %v271, 2
    %v292 = vmul.f32 %v269, %v288
    %v293 = vmul.f32 %v271, %v289
    %v294 = vlaneseq
    %v295 = vshrl.u32 %v294, 7
    %v296 = vsub.s32 0, %v295
    %v297 = vrot.slane %v292, %v296
    %v298 = vlaneseq
    %v299 = vshrl.u32 %v298, 7
    %v300 = vsub.s32 0, %v299
    %v301 = vrot.slane %v293, %v300
    %v302 = vmul.f32 %v287, %v297
    %v303 = vmul.f32 %v286, %v301
    %v304 = vmul.f32 %v285, %v297
    %v305 = vmul.f32 %v284, %v301
    %306 = vrot.lane.b32.xlu0 %v265, 16
    %v307 = vpop.permute.xlu0 %306
    %308 = vrot.lane.b32.xlu0 %v266, 16
    %v309 = vpop.permute.xlu0 %308
    %310 = vrot.lane.b32.xlu0 %v267, 16
    %v311 = vpop.permute.xlu0 %310
    %312 = vrot.lane.b32.xlu0 %v268, 16
    %v313 = vpop.permute.xlu0 %312
    %vm314 = vcmp.lt.s32.totalorder %v282, 16
    %v315 = vsel %vm314, %v311, %v313
    %v316 = vsel %vm314, %v309, %v311
    %v317 = vsel %vm314, %v307, %v309
    %v318 = vsel %vm314, %v313, %v307
    %v319 = vlaneseq
    %v320 = vshrl.u32 %v319, 7
    %v321 = vsub.s32 0, %v320
    %v322 = vrot.slane %v269, %v321
    %v323 = vlaneseq
    %v324 = vshrl.u32 %v323, 7
    %v325 = vsub.s32 0, %v324
    %v326 = vrot.slane %v271, %v325
    %v327 = vmul.f32 %v318, %v322
    %v328 = vmul.f32 %v317, %v326
    %v329 = vmul.f32 %v316, %v322
    %v330 = vmul.f32 %v315, %v326
    %331 = vrot.lane.b32.xlu0 %v265, 15
    %v332 = vpop.permute.xlu0 %331
    %333 = vrot.lane.b32.xlu0 %v266, 15
    %v334 = vpop.permute.xlu0 %333
    %335 = vrot.lane.b32.xlu0 %v267, 15
    %v336 = vpop.permute.xlu0 %335
    %337 = vrot.lane.b32.xlu0 %v268, 15
    %v338 = vpop.permute.xlu0 %337
    %vm339 = vcmp.lt.s32.totalorder %v282, 15
    %v340 = vsel %vm339, %v336, %v338
    %v341 = vsel %vm339, %v334, %v336
    %v342 = vsel %vm339, %v332, %v334
    %v343 = vsel %vm339, %v338, %v332
    %v344 = vrot.slane %v269, 3
    %v345 = vrot.slane %v271, 3
    %v348 = vmul.f32 %v269, %v344
    %v349 = vmul.f32 %v271, %v345
    %v350 = vlaneseq
    %v351 = vshrl.u32 %v350, 7
    %v352 = vsub.s32 0, %v351
    %v353 = vrot.slane %v348, %v352
    %v354 = vlaneseq
    %v355 = vshrl.u32 %v354, 7
    %v356 = vsub.s32 0, %v355
    %v357 = vrot.slane %v349, %v356
    %v358 = vmul.f32 %v343, %v353
    %v359 = vmul.f32 %v342, %v357
    %v360 = vmul.f32 %v341, %v353
    %v361 = vmul.f32 %v340, %v357
    %362 = vrot.lane.b32.xlu0 %v265, 1
    %v363 = vpop.permute.xlu0 %362
    %364 = vrot.lane.b32.xlu0 %v266, 1
    %v365 = vpop.permute.xlu0 %364
    %366 = vrot.lane.b32.xlu0 %v267, 1
    %v367 = vpop.permute.xlu0 %366
    %368 = vrot.lane.b32.xlu0 %v268, 1
    %v369 = vpop.permute.xlu0 %368
    %vm370 = vcmp.lt.s32.totalorder %v282, 1
    %v371 = vsel %vm370, %v367, %v369
    %v372 = vsel %vm370, %v365, %v367
    %v373 = vsel %vm370, %v363, %v365
    %v374 = vsel %vm370, %v369, %v363
    %v375 = vlaneseq
    %v376 = vshrl.u32 %v375, 7
    %v377 = vsub.s32 2, %v376
    %v378 = vrot.slane %v269, %v377
    %v379 = vlaneseq
    %v380 = vshrl.u32 %v379, 7
    %v381 = vsub.s32 2, %v380
    %v382 = vrot.slane %v271, %v381
    %v383 = vmul.f32 %v374, %v378
    %v384 = vmul.f32 %v373, %v382
    %v385 = vmul.f32 %v372, %v378
    %v386 = vmul.f32 %v371, %v382
    %387 = vrot.lane.b32.xlu0 %v265, 127
    %v388 = vpop.permute.xlu0 %387
    %389 = vrot.lane.b32.xlu0 %v266, 127
    %v390 = vpop.permute.xlu0 %389
    %391 = vrot.lane.b32.xlu0 %v267, 127
    %v392 = vpop.permute.xlu0 %391
    %393 = vrot.lane.b32.xlu0 %v268, 127
    %v394 = vpop.permute.xlu0 %393
    %vm395 = vcmp.lt.s32.totalorder %v282, 127
    %v396 = vsel %vm395, %v392, %v394
    %v397 = vsel %vm395, %v390, %v392
    %v398 = vsel %vm395, %v388, %v390
    %v399 = vsel %vm395, %v394, %v388
    %v400 = vlaneseq
    %v401 = vshrl.u32 %v400, 7
    %v402 = vsub.s32 3, %v401
    %v403 = vrot.slane %v269, %v402
    %v404 = vlaneseq
    %v405 = vshrl.u32 %v404, 7
    %v406 = vsub.s32 3, %v405
    %v407 = vrot.slane %v271, %v406
    %v408 = vmul.f32 %v398, %v403
    %v409 = vmul.f32 %v397, %v407
    %v410 = vmul.f32 %v396, %v403
    %v411 = vmul.f32 %v399, %v407
    %412 = vrot.lane.b32.xlu0 %v265, 113
    %v413 = vpop.permute.xlu0 %412
    %414 = vrot.lane.b32.xlu0 %v266, 113
    %v415 = vpop.permute.xlu0 %414
    %416 = vrot.lane.b32.xlu0 %v267, 113
    %v417 = vpop.permute.xlu0 %416
    %418 = vrot.lane.b32.xlu0 %v268, 113
    %v419 = vpop.permute.xlu0 %418
    %vm420 = vcmp.lt.s32.totalorder %v282, 113
    %v421 = vsel %vm420, %v417, %v419
    %v422 = vsel %vm420, %v415, %v417
    %v423 = vsel %vm420, %v413, %v415
    %v424 = vsel %vm420, %v419, %v413
    %v425 = vrot.slane %v269, 1
    %v426 = vrot.slane %v271, 1
    %v429 = vmul.f32 %v269, %v425
    %v430 = vmul.f32 %v271, %v426
    %v431 = vlaneseq
    %v432 = vshrl.u32 %v431, 7
    %v433 = vsub.s32 1, %v432
    %v434 = vrot.slane %v429, %v433
    %v435 = vlaneseq
    %v436 = vshrl.u32 %v435, 7
    %v437 = vsub.s32 1, %v436
    %v438 = vrot.slane %v430, %v437
    %v439 = vmul.f32 %v423, %v434
    %v440 = vmul.f32 %v422, %v438
    %v441 = vmul.f32 %v421, %v434
    %v442 = vmul.f32 %v424, %v438
    %443 = vrot.lane.b32.xlu0 %v265, 112
    %v444 = vpop.permute.xlu0 %443
    %445 = vrot.lane.b32.xlu0 %v266, 112
    %v446 = vpop.permute.xlu0 %445
    %447 = vrot.lane.b32.xlu0 %v267, 112
    %v448 = vpop.permute.xlu0 %447
    %449 = vrot.lane.b32.xlu0 %v268, 112
    %v450 = vpop.permute.xlu0 %449
    %vm451 = vcmp.lt.s32.totalorder %v282, 112
    %v452 = vsel %vm451, %v448, %v450
    %v453 = vsel %vm451, %v446, %v448
    %v454 = vsel %vm451, %v444, %v446
    %v455 = vsel %vm451, %v450, %v444
    %v456 = vlaneseq
    %v457 = vshrl.u32 %v456, 7
    %v458 = vsub.s32 1, %v457
    %v459 = vrot.slane %v269, %v458
    %v460 = vlaneseq
    %v461 = vshrl.u32 %v460, 7
    %v462 = vsub.s32 1, %v461
    %v463 = vrot.slane %v271, %v462
    %v464 = vmul.f32 %v454, %v459
    %v465 = vmul.f32 %v453, %v463
    %v466 = vmul.f32 %v452, %v459
    %v467 = vmul.f32 %v455, %v463
    %468 = vrot.lane.b32.xlu0 %v265, 111
    %v469 = vpop.permute.xlu0 %468
    %470 = vrot.lane.b32.xlu0 %v266, 111
    %v471 = vpop.permute.xlu0 %470
    %472 = vrot.lane.b32.xlu0 %v267, 111
    %v473 = vpop.permute.xlu0 %472
    %474 = vrot.lane.b32.xlu0 %v268, 111
    %v475 = vpop.permute.xlu0 %474
    %vm476 = vcmp.lt.s32.totalorder %v282, 111
    %v477 = vsel %vm476, %v473, %v475
    %v478 = vsel %vm476, %v471, %v473
    %v479 = vsel %vm476, %v469, %v471
    %v480 = vsel %vm476, %v475, %v469
    %v481 = vlaneseq
    %v482 = vshrl.u32 %v481, 7
    %v483 = vsub.s32 1, %v482
    %v484 = vrot.slane %v292, %v483
    %v485 = vlaneseq
    %v486 = vshrl.u32 %v485, 7
    %v487 = vsub.s32 1, %v486
    %v488 = vrot.slane %v293, %v487
    %v489 = vmul.f32 %v479, %v484
    %v490 = vmul.f32 %v478, %v488
    %v491 = vmul.f32 %v477, %v484
    %v492 = vmul.f32 %v480, %v488
    %v493 = vld [vmem:[#allocation8] sm:$0x3]
    %v494 = vpack.c.bf16 %v327, %v302
    %v495 = vpack.c.bf16 %v328, %v303
    %v496 = vpack.c.bf16 %v329, %v304
    %v497 = vpack.c.bf16 %v330, %v305
    %v498 = vpack.c.bf16 %v383, %v358
    %v499 = vpack.c.bf16 %v384, %v359
    %v500 = vpack.c.bf16 %v385, %v360
    %v501 = vpack.c.bf16 %v386, %v361
    %v502 = vpack.c.bf16 %v408, %v265
    %v503 = vpack.c.bf16 %v409, %v266
    %v504 = vpack.c.bf16 %v410, %v267
    %v505 = vpack.c.bf16 %v411, %v268
    %v506 = vpack.c.bf16 %v464, %v439
    %v507 = vpack.c.bf16 %v465, %v440
    %v508 = vpack.c.bf16 %v466, %v441
    %v509 = vpack.c.bf16 %v467, %v442
    %v510 = vpack.c.bf16 %v489, %v489
    %v511 = vpack.c.bf16 %v490, %v490
    %v512 = vpack.c.bf16 %v491, %v491
    %v513 = vpack.c.bf16 %v492, %v492
    %v514 = vld [vmem:[#allocation10] sm:$0xf]
    %516 = vset.pattern.permute.xlu0 0
    %517 = vperm.xlu0 %516, %v514
    %v518 = vpop.permute.xlu0 %517
    %vm520 = vcmask 588800
    %v522 = vsel %vm520, %v493, 0
    %vm524 = vcmask 1043456
    %v526 = vsel %vm524, %v510, 0
    %v529 = vsel %vm524, %v511, 0
    %v532 = vsel %vm524, %v512, 0
    %v535 = vsel %vm524, %v513, 0
    %537 = vmatprep.subr.bf16.mxu0 %v495
    %538 = vmatpush1.bf16.msra.mxu0 %v494
    %539 = vmatprep.subr.bf16.mxu0 %v499
    %540 = vmatpush1.bf16.msra.mxu0 %v498
    %541 = vmatprep.subr.bf16.mxu0 %v503
    %542 = vmatpush1.bf16.msra.mxu0 %v502
    %543 = vmatprep.subr.bf16.mxu0 %v507
    %544 = vmatpush1.bf16.msra.mxu0 %v506
    %545 = vmatprep.subr.bf16.mxu0 %v529
    %546 = vmatpush1.bf16.msra.mxu0 %v526
    %547 = vmatprep.subr.bf16.mxu0 0
    %548 = vmatpush1.bf16.msra.mxu0 0
    %549 = vmatprep.subr.bf16.mxu0 0
    %550 = vmatpush1.bf16.msra.mxu0 0
    %551 = vmatprep.subr.bf16.mxu0 0
    %552 = vmatpush1.bf16.msra.mxu0 0
    %553 = vmatprep.subr.bf16.mxu0 0
    %554 = vmatpush1.bf16.msra.mxu0 0
    %555 = vmatprep.subr.bf16.mxu0 0
    %556 = vmatpush1.bf16.msra.mxu0 0
    %557 = vmatprep.subr.bf16.mxu0 0
    %558 = vmatpush1.bf16.msra.mxu0 0
    %559 = vmatprep.subr.bf16.mxu0 0
    %560 = vmatpush1.bf16.msra.mxu0 0
    %561 = vmatprep.subr.bf16.mxu0 0
    %562 = vmatpush1.bf16.msra.mxu0 0
    %563 = vmatprep.subr.bf16.mxu0 0
    %564 = vmatpush1.bf16.msra.mxu0 0
    %565 = vmatprep.subr.bf16.mxu0 0
    %566 = vmatpush1.bf16.msra.mxu0 0
    %567 = vmatprep.subr.bf16.mxu0 0
    %568 = vmatpush1.bf16.msra.mxu0 0
    %569 = vmatprep.mubr.bf16.mxu0 0
    %570 = vmatmul.mubr.bf16.gmra.mrb[0].mxu0 %v522
    %v571 = vpop.f32.mrb[0].mxu0
    %v572 = vadd.f32 %v518, %v571
    %v573 = vpop.f32.mrb[0].mxu0
    %v574 = vadd.f32 %v518, %v573
    %v575 = vpop.f32.mrb[0].mxu0
    %v576 = vpop.f32.mrb[0].mxu0
    %577 = vdwg.mxu0
    %578 = vmatprep.subr.bf16.mxu0 %v497
    %579 = vmatpush1.bf16.msra.mxu0 %v496
    %580 = vmatprep.subr.bf16.mxu0 %v501
    %581 = vmatpush1.bf16.msra.mxu0 %v500
    %582 = vmatprep.subr.bf16.mxu0 %v505
    %583 = vmatpush1.bf16.msra.mxu0 %v504
    %584 = vmatprep.subr.bf16.mxu0 %v509
    %585 = vmatpush1.bf16.msra.mxu0 %v508
    %586 = vmatprep.subr.bf16.mxu0 %v535
    %587 = vmatpush1.bf16.msra.mxu0 %v532
    %588 = vmatprep.subr.bf16.mxu0 0
    %589 = vmatpush1.bf16.msra.mxu0 0
    %590 = vmatprep.subr.bf16.mxu0 0
    %591 = vmatpush1.bf16.msra.mxu0 0
    %592 = vmatprep.subr.bf16.mxu0 0
    %593 = vmatpush1.bf16.msra.mxu0 0
    %594 = vmatprep.subr.bf16.mxu0 0
    %595 = vmatpush1.bf16.msra.mxu0 0
    %596 = vmatprep.subr.bf16.mxu0 0
    %597 = vmatpush1.bf16.msra.mxu0 0
    %598 = vmatprep.subr.bf16.mxu0 0
    %599 = vmatpush1.bf16.msra.mxu0 0
    %600 = vmatprep.subr.bf16.mxu0 0
    %601 = vmatpush1.bf16.msra.mxu0 0
    %602 = vmatprep.subr.bf16.mxu0 0
    %603 = vmatpush1.bf16.msra.mxu0 0
    %604 = vmatprep.subr.bf16.mxu0 0
    %605 = vmatpush1.bf16.msra.mxu0 0
    %606 = vmatprep.subr.bf16.mxu0 0
    %607 = vmatpush1.bf16.msra.mxu0 0
    %608 = vmatprep.subr.bf16.mxu0 0
    %609 = vmatpush1.bf16.msra.mxu0 0
    %610 = vmatprep.mubr.bf16.mxu0 0
    %611 = vmatmul.mubr.bf16.gmra.mrb[0].mxu0 %v522
    %v612 = vpop.f32.mrb[0].mxu0
    %v613 = vadd.f32 %v518, %v612
    %v614 = vpop.f32.mrb[0].mxu0
    %v615 = vadd.f32 %v518, %v614
    %v616 = vpop.f32.mrb[0].mxu0
    %v617 = vpop.f32.mrb[0].mxu0
    %618 = vdwg.mxu0
    %v619 = vmin.f32 %v572, 20.0
    %v620 = vmin.f32 %v574, 20.0
    %v621 = vmin.f32 %v613, 20.0
    %v622 = vmin.f32 %v615, 20.0
    %v623 = vmul.f32 %v619, 1.442695
    %v624 = vpow.pop %v623
    %v625 = vmul.f32 %v620, 1.442695
    %v626 = vpow.pop %v625
    %v627 = vmul.f32 %v621, 1.442695
    %v628 = vpow.pop %v627
    %v629 = vmul.f32 %v622, 1.442695
    %v630 = vpow.pop %v629
    %v631 = vadd.f32 %v624, 2.0
    %v632 = vadd.f32 %v626, 2.0
    %v633 = vadd.f32 %v628, 2.0
    %v634 = vadd.f32 %v630, 2.0
    %v635 = vmul.f32 %v624, %v631
    %v636 = vmul.f32 %v626, %v632
    %v637 = vmul.f32 %v628, %v633
    %v638 = vmul.f32 %v630, %v634
    %v639 = vadd.f32 %v635, 2.0
    %v640 = vadd.f32 %v636, 2.0
    %v641 = vadd.f32 %v637, 2.0
    %v642 = vadd.f32 %v638, 2.0
    %v643 = vrcp.pop %v639
    %v644 = vrcp.pop %v640
    %v645 = vrcp.pop %v641
    %v646 = vrcp.pop %v642
    %v647 = vmul.f32 %v639, %v643
    %v648 = vmul.f32 %v640, %v644
    %v649 = vmul.f32 %v641, %v645
    %v650 = vmul.f32 %v642, %v646
    %v651 = vsub.f32 2.0, %v647
    %v652 = vsub.f32 2.0, %v648
    %v653 = vsub.f32 2.0, %v649
    %v654 = vsub.f32 2.0, %v650
    %v655 = vmul.f32 %v643, %v651
    %v656 = vmul.f32 %v644, %v652
    %v657 = vmul.f32 %v645, %v653
    %v658 = vmul.f32 %v646, %v654
    %vm659 = vcmp.gt.f32.partialorder %v572, 20.0
    %vm660 = vcmp.gt.f32.partialorder %v574, 20.0
    %vm661 = vcmp.gt.f32.partialorder %v613, 20.0
    %vm662 = vcmp.gt.f32.partialorder %v615, 20.0
    %v663 = vmul.f32 %v635, %v655
    %v664 = vmul.f32 %v636, %v656
    %v665 = vmul.f32 %v637, %v657
    %v666 = vmul.f32 %v638, %v658
    %v667 = vmul.f32 %v572, %v663
    %v668 = vmul.f32 %v574, %v664
    %v669 = vmul.f32 %v613, %v665
    %v670 = vmul.f32 %v615, %v666
    %v671 = vsel %vm659, %v572, %v667
    %v672 = vsel %vm660, %v574, %v668
    %v673 = vsel %vm661, %v613, %v669
    %v674 = vsel %vm662, %v615, %v670
    %v675 = vadd.f32 %v671, %v95
    %v676 = vadd.f32 %v672, %v100
    %v677 = vadd.f32 %v673, %v96
    %v678 = vadd.f32 %v674, %v101
    %v683 = vcombine.low %v675, %v676
    %v684 = vcombine.low %v677, %v678
    %687 = vst [vmem:[#allocation13] sm:$0xff] %v683
    %688 = vst [vmem:[#allocation13 + $0x8] sm:$0xff] %v684
    // Predicated region
    $region50: #{tpu_custom_call.1} parent=1 // pred_check
      _
    $region51: #{tpu_custom_call.1} parent=1 // pred_check_branch
      %690 = sbr.rel (0) target = $region53
    $region52: #{tpu_custom_call.1} parent=1 // pred_region
      %s692 = ssub.s32 256, 256
      %693 = vsyncadd [#allocation4], %s692
      %s695 = sshll.u32 [#allocation13], 4
      %s696 = int_to_ptr.vmem [resolvable:$true] %s695
      %698 = dma.vmem_to_hbm [thread:$0]  %s696, 256, %s6, [#allocation4]
    $region53: #{tpu_custom_call.1} parent=1 // pred_fallthru
      _
    // Predicated region
    $region54: #{tpu_custom_call.1} parent=1 // pred_check
      _
    $region55: #{tpu_custom_call.1} parent=1 // pred_check_branch
      %700 = sbr.rel (0) target = $region57
    $region56: #{tpu_custom_call.1} parent=1 // pred_region
      %701 = dma.done [#allocation4], 256
    $region57: #{tpu_custom_call.1} parent=1 // pred_fallthru
      _
    %702 = vsyncpa [#allocation3], 1
    %703 = vsyncpa [#allocation6], 1
    %704 = vsyncpa [#allocation9], 1
    %705 = vsyncpa [#allocation12], 1
    %706 = vsyncpa [#allocation4], 1

</llo_original>
